<compile_context>
chip_gen: v6e
topology: v6e:2x2x1
jax: 0.10.0
libtpu: 0.0.40
codegen_flags: <defaults>
</compile_context>

<pallas_src>
import jax
import jax.numpy as jnp
from jax.experimental import pallas as pl
from jax.experimental.pallas import tpu as pltpu


def _wen_lstm_seq_kernel(x_ref, y_ref, h0_ref, c0_ref, wg_ref, who_ref,
                         h_out_ref, c_out_ref, p_out_ref,
                         h_scr, c_scr):
    t = pl.program_id(0)
    T = pl.num_programs(0)
    H = h0_ref.shape[1]
    cdt = wg_ref.dtype                      # MXU operand dtype (f32 or bf16)

    @pl.when(t == 0)
    def _init():
        h_scr[...] = h0_ref[...]
        c_scr[...] = c0_ref[...]
        p_out_ref[...] = jnp.zeros_like(p_out_ref)

    x_t = x_ref[0]                          # [B, Ew+Eda]  f32 (streamed)
    h_prev = h_scr[...]                     # [B, H]       f32 (carried)
    c_prev = c_scr[...]

    # Fused gate matmul: one K = Ew+Eda+H push against the resident (reordered) Wgate.
    xh = jnp.concatenate([x_t, h_prev], axis=-1).astype(cdt)
    gates = jnp.dot(xh, wg_ref[...], preferred_element_type=jnp.float32)   # [B,4H] f32

    sg = jax.nn.sigmoid(gates[:, :3 * H])   # i, f, o in one transcendental region
    ig = sg[:, 0 * H:1 * H]
    fg = sg[:, 1 * H:2 * H]
    og = sg[:, 2 * H:3 * H]
    cx = jnp.tanh(gates[:, 3 * H:])

    c_t = ig * cx + fg * c_prev
    h_t = og * jnp.tanh(c_t)

    # Output projection -> target probability WITHOUT materializing softmax(o_t).
    logits = jnp.dot(h_t.astype(cdt), who_ref[...],
                     preferred_element_type=jnp.float32)                   # [B,V] f32
    m = jnp.max(logits, axis=-1, keepdims=True)
    e = jnp.exp(logits - m)
    ids = y_ref[0]                                                         # [B,1] int32
    col = jax.lax.broadcasted_iota(jnp.int32, e.shape, 1)
    tgt = jnp.sum(jnp.where(col == ids, e, 0.0), axis=-1, keepdims=True)   # exp(logit[y])
    denom = jnp.sum(e, axis=-1, keepdims=True)
    p_t = tgt * pl.reciprocal(denom, approx=True)                          # [B,1]

    # Carry recurrent state.
    h_scr[...] = h_t
    c_scr[...] = c_t

    # Lane-dense resident p tile: write column t; single HBM writeback at grid end.
    lane = jax.lax.broadcasted_iota(jnp.int32, p_out_ref.shape, 1)
    p_out_ref[...] = jnp.where(lane == t, p_t, p_out_ref[...])

    @pl.when(t == T - 1)
    def _finish():
        h_out_ref[...] = h_t
        c_out_ref[...] = c_t


def wen_lstm_sequence(w_seq, y_seq, da_seq, h0, c0, Wgate, Who, *,
                      param_dtype=jnp.float32):
    """Run T recurrent WenLSTM steps inside a single Pallas kernel.

    w_seq [T,B,Ew], y_seq [T,B] int, da_seq [T,B,Eda], h0/c0 [B,H],
    Wgate [Ew+H+Eda, 4H], Who [H,V].
    Returns (h_T [B,H], c_T [B,H], p [T,B]).
    """
    T, B, Ew = w_seq.shape
    Eda = da_seq.shape[-1]
    H = h0.shape[-1]
    V = Who.shape[-1]
    EX = Ew + Eda

    # Pre-concatenate the non-recurrent per-step inputs once in the wrapper.
    x_seq = jnp.concatenate([w_seq, da_seq], axis=-1).astype(jnp.float32)   # [T,B,EX]
    y3 = y_seq.reshape(T, B, 1).astype(jnp.int32)
    # Reorder Wgate rows from the module's (w, h, da) concat order to the kernel's
    # (w, da, h) order so the gate matmul is a single fused K = EX+H dot.
    Wg_r = jnp.concatenate([Wgate[:Ew], Wgate[Ew + H:], Wgate[Ew:Ew + H]],
                           axis=0).astype(param_dtype)
    Who_c = Who.astype(param_dtype)

    h_t, c_t, p_bt = pl.pallas_call(
        _wen_lstm_seq_kernel,
        grid=(T,),
        in_specs=[
            pl.BlockSpec((1, B, EX), lambda t: (t, 0, 0)),    # x_t   (streamed)
            pl.BlockSpec((1, B, 1), lambda t: (t, 0, 0)),     # y_t   (streamed)
            pl.BlockSpec((B, H), lambda t: (0, 0)),           # h0    (resident)
            pl.BlockSpec((B, H), lambda t: (0, 0)),           # c0    (resident)
            pl.BlockSpec((EX + H, 4 * H), lambda t: (0, 0)),  # Wgate (resident)
            pl.BlockSpec((H, V), lambda t: (0, 0)),           # Who   (resident)
        ],
        out_specs=(
            pl.BlockSpec((B, H), lambda t: (0, 0)),
            pl.BlockSpec((B, H), lambda t: (0, 0)),
            pl.BlockSpec((B, T), lambda t: (0, 0)),
        ),
        out_shape=(
            jax.ShapeDtypeStruct((B, H), jnp.float32),
            jax.ShapeDtypeStruct((B, H), jnp.float32),
            jax.ShapeDtypeStruct((B, T), jnp.float32),
        ),
        scratch_shapes=[
            pltpu.VMEM((B, H), jnp.float32),   # h carry
            pltpu.VMEM((B, H), jnp.float32),   # c carry
        ],
        compiler_params=pltpu.CompilerParams(
            dimension_semantics=("arbitrary",)),               # recurrent over t
    )(x_seq, y3, h0, c0, Wg_r, Who_c)
    return h_t, c_t, p_bt.T


def wen_lstm_forward(w_i, y_i, da_emb_t, h_tm1, c_tm1, Wgate, Who, *,
                     param_dtype=jnp.float32):
    """Single-step forward matching the PyTorch module: returns (h_t, c_t, p_t[B])."""
    h_t, c_t, p = wen_lstm_sequence(w_i[None], y_i[None], da_emb_t[None],
                                    h_tm1, c_tm1, Wgate, Who,
                                    param_dtype=param_dtype)
    return h_t, c_t, p[0]


# ----------------------------- pure-JAX reference -----------------------------

def _reference_step(w_i, y_i, da, h, c, Wgate, Who):
    H = h.shape[1]
    x = jnp.concatenate((w_i, h, da), axis=1)
    gates = x @ Wgate
    ig = jax.nn.sigmoid(gates[:, :H])
    fg = jax.nn.sigmoid(gates[:, H:2 * H])
    og = jax.nn.sigmoid(gates[:, 2 * H:3 * H])
    cx = jnp.tanh(gates[:, 3 * H:])
    c_t = ig * cx + fg * c
    h_t = og * jnp.tanh(c_t)
    o_t = jax.nn.softmax(h_t @ Who, axis=-1)
    p_t = o_t[jnp.arange(h_t.shape[0]), y_i]
    return h_t, c_t, p_t


def _reference_sequence(w_seq, y_seq, da_seq, h0, c0, Wgate, Who):
    h, c = h0, c0
    ps = []
    for t in range(w_seq.shape[0]):
        h, c, p = _reference_step(w_seq[t], y_seq[t], da_seq[t], h, c, Wgate, Who)
        ps.append(p)
    return h, c, jnp.stack(ps, axis=0)


if __name__ == "__main__":
    B, Ew, Eda, H, V, T = 8, 16, 16, 32, 128, 16

    key = jax.random.PRNGKey(0)
    k = jax.random.split(key, 7)
    w_seq = jax.random.normal(k[0], (T, B, Ew), dtype=jnp.float32)
    da_seq = jax.random.normal(k[1], (T, B, Eda), dtype=jnp.float32)
    h0 = jax.random.normal(k[2], (B, H), dtype=jnp.float32)
    c0 = jax.random.normal(k[3], (B, H), dtype=jnp.float32)
    y_seq = jax.random.randint(k[4], (T, B), 0, V, dtype=jnp.int32)
    Wgate = 0.1 * jax.random.normal(k[5], (Ew + H + Eda, 4 * H), dtype=jnp.float32)
    Who = 0.1 * jax.random.normal(k[6], (H, V), dtype=jnp.float32)

    # Full-sequence kernel, f32 params.
    h_t, c_t, p_t = wen_lstm_sequence(w_seq, y_seq, da_seq, h0, c0, Wgate, Who)
    jax.block_until_ready((h_t, c_t, p_t))
    h_r, c_r, p_r = _reference_sequence(w_seq, y_seq, da_seq, h0, c0, Wgate, Who)
    assert jnp.allclose(h_t, h_r, atol=1e-3, rtol=1e-3)
    assert jnp.allclose(c_t, c_r, atol=1e-3, rtol=1e-3)
    assert jnp.allclose(p_t, p_r, atol=2e-3, rtol=2e-3)   # approx reciprocal in kernel

    # Single-step path (exactly the module's forward).
    h1, c1, p1 = wen_lstm_forward(w_seq[0], y_seq[0], da_seq[0], h0, c0, Wgate, Who)
    jax.block_until_ready((h1, c1, p1))
    h1r, c1r, p1r = _reference_step(w_seq[0], y_seq[0], da_seq[0], h0, c0, Wgate, Who)
    assert jnp.allclose(h1, h1r, atol=1e-4, rtol=1e-4)
    assert jnp.allclose(c1, c1r, atol=1e-4, rtol=1e-4)
    assert jnp.allclose(p1, p1r, atol=2e-3, rtol=2e-3)

    # bf16 MXU operands (native MXU dtype on v5e/v6e/v7x), f32 accumulation.
    hb, cb, pb = wen_lstm_sequence(w_seq, y_seq, da_seq, h0, c0, Wgate, Who,
                                   param_dtype=jnp.bfloat16)
    jax.block_until_ready((hb, cb, pb))
    assert jnp.allclose(hb, h_r, atol=5e-2, rtol=5e-2)
    assert jnp.allclose(cb, c_r, atol=5e-2, rtol=5e-2)
    assert jnp.allclose(pb, p_r, atol=5e-2, rtol=5e-2)

    print("KERNEL_OK")
</pallas_src>

<mosaic_0001>
module attributes {stable_mosaic.version = 11 : i64} {
  func.func @_wen_lstm_seq_kernel(%arg0: i32, %arg1: memref<1x8x32xf32, #tpu.memory_space<vmem>>, %arg2: memref<1x8x1xi32, #tpu.memory_space<vmem>>, %arg3: memref<8x32xf32, #tpu.memory_space<vmem>>, %arg4: memref<8x32xf32, #tpu.memory_space<vmem>>, %arg5: memref<64x128xf32, #tpu.memory_space<vmem>>, %arg6: memref<32x128xf32, #tpu.memory_space<vmem>>, %arg7: memref<8x32xf32, #tpu.memory_space<vmem>>, %arg8: memref<8x32xf32, #tpu.memory_space<vmem>>, %arg9: memref<8x16xf32, #tpu.memory_space<vmem>>, %arg10: memref<8x32xf32, #tpu.memory_space<vmem>>, %arg11: memref<8x32xf32, #tpu.memory_space<vmem>>) attributes {dimension_semantics = [#tpu.dimension_semantics<arbitrary>], iteration_bounds = array<i64: 16>, scalar_prefetch = 0 : i64, scratch_operands = 2 : i64, tpu.core_type = #tpu.core_type<tc>, window_params = [{transform_indices = @transform_0, window_bounds = array<i64: 1, 8, 32>}, {transform_indices = @transform_1, window_bounds = array<i64: 1, 8, 1>}, {pipeline_mode = #tpu.pipeline_mode<synchronous>, transform_indices = @transform_2, window_bounds = array<i64: 8, 32>}, {pipeline_mode = #tpu.pipeline_mode<synchronous>, transform_indices = @transform_3, window_bounds = array<i64: 8, 32>}, {pipeline_mode = #tpu.pipeline_mode<synchronous>, transform_indices = @transform_4, window_bounds = array<i64: 64, 128>}, {pipeline_mode = #tpu.pipeline_mode<synchronous>, transform_indices = @transform_5, window_bounds = array<i64: 32, 128>}, {pipeline_mode = #tpu.pipeline_mode<synchronous>, transform_indices = @transform_6, window_bounds = array<i64: 8, 32>}, {pipeline_mode = #tpu.pipeline_mode<synchronous>, transform_indices = @transform_7, window_bounds = array<i64: 8, 32>}, {pipeline_mode = #tpu.pipeline_mode<synchronous>, transform_indices = @transform_8, window_bounds = array<i64: 8, 16>}]} {
    %c0_i32 = arith.constant 0 : i32
    %0 = arith.cmpi eq, %arg0, %c0_i32 : i32
    %1 = arith.extui %0 : i1 to i32
    %c0_i32_0 = arith.constant 0 : i32
    %2 = arith.cmpi ne, %1, %c0_i32_0 : i32
    scf.if %2 {
      %c0_29 = arith.constant 0 : index
      %c0_30 = arith.constant 0 : index
      %59 = vector.load %arg3[%c0_29, %c0_30] : memref<8x32xf32, #tpu.memory_space<vmem>>, vector<8x32xf32>
      %c0_31 = arith.constant 0 : index
      %c0_32 = arith.constant 0 : index
      %60 = vector.load %arg10[%c0_31, %c0_32] : memref<8x32xf32, #tpu.memory_space<vmem>>, vector<8x32xf32>
      tpu.vector_store %arg10[%c0_31, %c0_32], %59 {strides = array<i32>} : memref<8x32xf32, #tpu.memory_space<vmem>>, vector<8x32xf32>,
      %c0_33 = arith.constant 0 : index
      %c0_34 = arith.constant 0 : index
      %61 = vector.load %arg4[%c0_33, %c0_34] : memref<8x32xf32, #tpu.memory_space<vmem>>, vector<8x32xf32>
      %c0_35 = arith.constant 0 : index
      %c0_36 = arith.constant 0 : index
      %62 = vector.load %arg11[%c0_35, %c0_36] : memref<8x32xf32, #tpu.memory_space<vmem>>, vector<8x32xf32>
      tpu.vector_store %arg11[%c0_35, %c0_36], %61 {strides = array<i32>} : memref<8x32xf32, #tpu.memory_space<vmem>>, vector<8x32xf32>,
      %cst_37 = arith.constant 0.000000e+00 : f32
      %63 = vector.broadcast %cst_37 : f32 to vector<8x16xf32>
      %c0_38 = arith.constant 0 : index
      %c0_39 = arith.constant 0 : index
      %64 = vector.load %arg9[%c0_38, %c0_39] : memref<8x16xf32, #tpu.memory_space<vmem>>, vector<8x16xf32>
      tpu.vector_store %arg9[%c0_38, %c0_39], %63 {strides = array<i32>} : memref<8x16xf32, #tpu.memory_space<vmem>>, vector<8x16xf32>,
    } else {
    }
    %c0 = arith.constant 0 : index
    %c0_1 = arith.constant 0 : index
    %c0_2 = arith.constant 0 : index
    %3 = vector.load %arg1[%c0, %c0_1, %c0_2] : memref<1x8x32xf32, #tpu.memory_space<vmem>>, vector<1x8x32xf32>
    %4 = vector.shape_cast %3 : vector<1x8x32xf32> to vector<8x32xf32>
    %c0_3 = arith.constant 0 : index
    %c0_4 = arith.constant 0 : index
    %5 = vector.load %arg10[%c0_3, %c0_4] : memref<8x32xf32, #tpu.memory_space<vmem>>, vector<8x32xf32>
    %c0_5 = arith.constant 0 : index
    %c0_6 = arith.constant 0 : index
    %6 = vector.load %arg11[%c0_5, %c0_6] : memref<8x32xf32, #tpu.memory_space<vmem>>, vector<8x32xf32>
    %7 = tpu.concatenate %4, %5 in 1 : vector<8x32xf32>, vector<8x32xf32> -> vector<8x64xf32>
    %c0_7 = arith.constant 0 : index
    %c0_8 = arith.constant 0 : index
    %8 = vector.load %arg5[%c0_7, %c0_8] : memref<64x128xf32, #tpu.memory_space<vmem>>, vector<64x128xf32>
    %cst = arith.constant dense<0.000000e+00> : vector<8x128xf32>
    %9 = tpu.matmul %7, %8, %cst {dimension_numbers = #tpu.dot_dimension_numbers<[1], [0], [0], [1], [0, 0, 1, 1], [], []>} : vector<8x64xf32>, vector<64x128xf32>, vector<8x128xf32> -> vector<8x128xf32>
    %10 = vector.extract_strided_slice %9 {offsets = [0, 0], sizes = [8, 96], strides = [1, 1]} : vector<8x128xf32> to vector<8x96xf32>
    %11 = arith.negf %10 : vector<8x96xf32>
    %12 = math.exp %11 : vector<8x96xf32>
    %cst_9 = arith.constant 1.000000e+00 : f32
    %13 = vector.broadcast %cst_9 : f32 to vector<8x96xf32>
    %14 = arith.addf %13, %12 : vector<8x96xf32>
    %15 = arith.divf %13, %14 : vector<8x96xf32>
    %16 = vector.extract_strided_slice %15 {offsets = [0, 0], sizes = [8, 32], strides = [1, 1]} : vector<8x96xf32> to vector<8x32xf32>
    %17 = vector.extract_strided_slice %15 {offsets = [0, 32], sizes = [8, 32], strides = [1, 1]} : vector<8x96xf32> to vector<8x32xf32>
    %18 = vector.extract_strided_slice %15 {offsets = [0, 64], sizes = [8, 32], strides = [1, 1]} : vector<8x96xf32> to vector<8x32xf32>
    %19 = vector.extract_strided_slice %9 {offsets = [0, 96], sizes = [8, 32], strides = [1, 1]} : vector<8x128xf32> to vector<8x32xf32>
    %20 = math.tanh %19 : vector<8x32xf32>
    %21 = arith.mulf %16, %20 : vector<8x32xf32>
    %22 = arith.mulf %17, %6 : vector<8x32xf32>
    %23 = arith.addf %21, %22 : vector<8x32xf32>
    %24 = math.tanh %23 : vector<8x32xf32>
    %25 = arith.mulf %18, %24 : vector<8x32xf32>
    %c0_10 = arith.constant 0 : index
    %c0_11 = arith.constant 0 : index
    %26 = vector.load %arg6[%c0_10, %c0_11] : memref<32x128xf32, #tpu.memory_space<vmem>>, vector<32x128xf32>
    %cst_12 = arith.constant dense<0.000000e+00> : vector<8x128xf32>
    %27 = tpu.matmul %25, %26, %cst_12 {dimension_numbers = #tpu.dot_dimension_numbers<[1], [0], [0], [1], [0, 0, 1, 1], [], []>} : vector<8x32xf32>, vector<32x128xf32>, vector<8x128xf32> -> vector<8x128xf32>
    %cst_13 = arith.constant dense<0xFF800000> : vector<8xf32>
    %28 = vector.multi_reduction <maximumf>, %27, %cst_13 [1] : vector<8x128xf32> to vector<8xf32>
    %29 = vector.shape_cast %28 : vector<8xf32> to vector<8x1xf32>
    %30 = vector.broadcast %29 : vector<8x1xf32> to vector<8x128xf32>
    %31 = arith.subf %27, %30 : vector<8x128xf32>
    %32 = math.exp %31 : vector<8x128xf32>
    %c0_14 = arith.constant 0 : index
    %c0_15 = arith.constant 0 : index
    %c0_16 = arith.constant 0 : index
    %33 = vector.load %arg2[%c0_14, %c0_15, %c0_16] : memref<1x8x1xi32, #tpu.memory_space<vmem>>, vector<1x8x1xi32>
    %34 = vector.shape_cast %33 : vector<1x8x1xi32> to vector<8x1xi32>
    %35 = tpu.iota {dimensions = array<i32: 1>} : vector<8x128xi32>
    %36 = vector.broadcast %34 : vector<8x1xi32> to vector<8x128xi32>
    %37 = arith.cmpi eq, %35, %36 : vector<8x128xi32>
    %cst_17 = arith.constant 0.000000e+00 : f32
    %38 = vector.broadcast %cst_17 : f32 to vector<8x128xf32>
    %39 = arith.select %37, %32, %38 : vector<8x128xi1>, vector<8x128xf32>
    %cst_18 = arith.constant dense<0.000000e+00> : vector<8xf32>
    %40 = vector.multi_reduction <add>, %39, %cst_18 [1] : vector<8x128xf32> to vector<8xf32>
    %41 = vector.shape_cast %40 : vector<8xf32> to vector<8x1xf32>
    %cst_19 = arith.constant dense<0.000000e+00> : vector<8xf32>
    %42 = vector.multi_reduction <add>, %32, %cst_19 [1] : vector<8x128xf32> to vector<8xf32>
    %43 = vector.shape_cast %42 : vector<8xf32> to vector<8x1xf32>
    %44 = tpu.reciprocal %43 {approx = true} : vector<8x1xf32> -> vector<8x1xf32>
    %45 = arith.mulf %41, %44 : vector<8x1xf32>
    %c0_20 = arith.constant 0 : index
    %c0_21 = arith.constant 0 : index
    %46 = vector.load %arg10[%c0_20, %c0_21] : memref<8x32xf32, #tpu.memory_space<vmem>>, vector<8x32xf32>
    tpu.vector_store %arg10[%c0_20, %c0_21], %25 {strides = array<i32>} : memref<8x32xf32, #tpu.memory_space<vmem>>, vector<8x32xf32>,
    %c0_22 = arith.constant 0 : index
    %c0_23 = arith.constant 0 : index
    %47 = vector.load %arg11[%c0_22, %c0_23] : memref<8x32xf32, #tpu.memory_space<vmem>>, vector<8x32xf32>
    tpu.vector_store %arg11[%c0_22, %c0_23], %23 {strides = array<i32>} : memref<8x32xf32, #tpu.memory_space<vmem>>, vector<8x32xf32>,
    %48 = tpu.iota {dimensions = array<i32: 1>} : vector<8x16xi32>
    %49 = vector.broadcast %arg0 : i32 to vector<8x16xi32>
    %50 = arith.cmpi eq, %48, %49 : vector<8x16xi32>
    %c0_24 = arith.constant 0 : index
    %c0_25 = arith.constant 0 : index
    %51 = vector.load %arg9[%c0_24, %c0_25] : memref<8x16xf32, #tpu.memory_space<vmem>>, vector<8x16xf32>
    %52 = vector.shape_cast %45 : vector<8x1xf32> to vector<8x1xf32>
    %53 = vector.broadcast %52 : vector<8x1xf32> to vector<8x16xf32>
    %54 = arith.select %50, %53, %51 : vector<8x16xi1>, vector<8x16xf32>
    %c0_26 = arith.constant 0 : index
    %c0_27 = arith.constant 0 : index
    %55 = vector.load %arg9[%c0_26, %c0_27] : memref<8x16xf32, #tpu.memory_space<vmem>>, vector<8x16xf32>
    tpu.vector_store %arg9[%c0_26, %c0_27], %54 {strides = array<i32>} : memref<8x16xf32, #tpu.memory_space<vmem>>, vector<8x16xf32>,
    %c15_i32 = arith.constant 15 : i32
    %56 = arith.cmpi eq, %arg0, %c15_i32 : i32
    %57 = arith.extui %56 : i1 to i32
    %c0_i32_28 = arith.constant 0 : i32
    %58 = arith.cmpi ne, %57, %c0_i32_28 : i32
    scf.if %58 {
      %c0_29 = arith.constant 0 : index
      %c0_30 = arith.constant 0 : index
      %59 = vector.load %arg7[%c0_29, %c0_30] : memref<8x32xf32, #tpu.memory_space<vmem>>, vector<8x32xf32>
      tpu.vector_store %arg7[%c0_29, %c0_30], %25 {strides = array<i32>} : memref<8x32xf32, #tpu.memory_space<vmem>>, vector<8x32xf32>,
      %c0_31 = arith.constant 0 : index
      %c0_32 = arith.constant 0 : index
      %60 = vector.load %arg8[%c0_31, %c0_32] : memref<8x32xf32, #tpu.memory_space<vmem>>, vector<8x32xf32>
      tpu.vector_store %arg8[%c0_31, %c0_32], %23 {strides = array<i32>} : memref<8x32xf32, #tpu.memory_space<vmem>>, vector<8x32xf32>,
    } else {
    }
    return
  }
  func.func @transform_0(%arg0: i32) -> (i32, i32, i32) {
    %c0_i32 = arith.constant 0 : i32
    %c0_i32_0 = arith.constant 0 : i32
    %c0_i32_1 = arith.constant 0 : i32
    return %arg0, %c0_i32, %c0_i32_0 : i32, i32, i32
  }
  func.func @transform_1(%arg0: i32) -> (i32, i32, i32) {
    %c0_i32 = arith.constant 0 : i32
    %c0_i32_0 = arith.constant 0 : i32
    %c0_i32_1 = arith.constant 0 : i32
    return %arg0, %c0_i32, %c0_i32_0 : i32, i32, i32
  }
  func.func @transform_2(%arg0: i32) -> (i32, i32) {
    %c0_i32 = arith.constant 0 : i32
    %c0_i32_0 = arith.constant 0 : i32
    %c0_i32_1 = arith.constant 0 : i32
    return %c0_i32, %c0_i32_0 : i32, i32
  }
  func.func @transform_3(%arg0: i32) -> (i32, i32) {
    %c0_i32 = arith.constant 0 : i32
    %c0_i32_0 = arith.constant 0 : i32
    %c0_i32_1 = arith.constant 0 : i32
    return %c0_i32, %c0_i32_0 : i32, i32
  }
  func.func @transform_4(%arg0: i32) -> (i32, i32) {
    %c0_i32 = arith.constant 0 : i32
    %c0_i32_0 = arith.constant 0 : i32
    %c0_i32_1 = arith.constant 0 : i32
    return %c0_i32, %c0_i32_0 : i32, i32
  }
  func.func @transform_5(%arg0: i32) -> (i32, i32) {
    %c0_i32 = arith.constant 0 : i32
    %c0_i32_0 = arith.constant 0 : i32
    %c0_i32_1 = arith.constant 0 : i32
    return %c0_i32, %c0_i32_0 : i32, i32
  }
  func.func @transform_6(%arg0: i32) -> (i32, i32) {
    %c0_i32 = arith.constant 0 : i32
    %c0_i32_0 = arith.constant 0 : i32
    %c0_i32_1 = arith.constant 0 : i32
    return %c0_i32, %c0_i32_0 : i32, i32
  }
  func.func @transform_7(%arg0: i32) -> (i32, i32) {
    %c0_i32 = arith.constant 0 : i32
    %c0_i32_0 = arith.constant 0 : i32
    %c0_i32_1 = arith.constant 0 : i32
    return %c0_i32, %c0_i32_0 : i32, i32
  }
  func.func @transform_8(%arg0: i32) -> (i32, i32) {
    %c0_i32 = arith.constant 0 : i32
    %c0_i32_0 = arith.constant 0 : i32
    %c0_i32_1 = arith.constant 0 : i32
    return %c0_i32, %c0_i32_0 : i32, i32
  }
}

</mosaic_0001>

<llo_original>
// kernel: tpu_custom_call.1
$region0: #{tpu_custom_call.1}
  #allocation0 [shape = 'u32[]', space=smem, size = 0x4, offset = 0x4, fixed_abs, tag = 'smem constant byte address 0x4 - core index']
  #allocation1 [shape = 'u32[144,128]{1,0:T(1,128)}', space=vmem, size = 0x12000, scoped, tag = 'internal scratch']
  #allocation2 [shape = 'f32[8,32]{1,0:T(8,128)}', space=vmem, size = 0x1000, scoped, tag = 'scratch operand']
  #allocation3 [shape = 'f32[8,32]{1,0:T(8,128)}', space=vmem, size = 0x1000, scoped, tag = 'scratch operand']
  %s0 = inlined_call_operand.vmem [shape: f32[16,8,32], index: 0, kind: input, shape index: {}]
  %s1 = inlined_call_operand.vmem [shape: s32[16,8,1], index: 1, kind: input, shape index: {}]
  %s2 = inlined_call_operand.vmem [shape: f32[8,32], index: 2, kind: input, shape index: {}]
  %s3 = inlined_call_operand.hbm [shape: f32[8,32], index: 3, kind: input, shape index: {}]
  %s4 = inlined_call_operand.hbm [shape: f32[64,128], index: 4, kind: input, shape index: {}]
  %s5 = inlined_call_operand.hbm [shape: f32[32,128], index: 5, kind: input, shape index: {}]
  %s6 = inlined_call_operand.hbm [shape: f32[8,32], index: 6, kind: output, shape index: {0}]
  %s7 = inlined_call_operand.hbm [shape: f32[8,32], index: 7, kind: output, shape index: {1}]
  %s8 = inlined_call_operand.hbm [shape: f32[8,16], index: 8, kind: output, shape index: {2}]
  %9 = xla_tuple %s6, %s7, %s8
  %s10 = sld [smem:[#allocation0]]
  $region93: #{tpu_custom_call.1} parent=0
    _
  %s12 = ssub.s32 1, %s10
  %s13 = scalar_select 0, %s12, %s10
  $region1: #{tpu_custom_call.1} parent=0
    #allocation4 [shape = 'u8[4096]{0}', space=vmem, size = 0x1000, scoped, tag = 'input window, operand 3, single buffered']
    #allocation5 [shape = 's32[2]{0}', space=sflag, size = 0x8, scoped, tag = 'scoped memory for tpu_custom_call.1']
    #allocation6 [shape = 's32[2]{0}', space=sflag, size = 0x8, scoped, tag = 'scoped memory for tpu_custom_call.1']
    #allocation7 [shape = 'u8[32768]{0}', space=vmem, size = 0x8000, scoped, tag = 'input window, operand 4, single buffered']
    #allocation8 [shape = 's32[1]{0}', space=sflag, size = 0x4, scoped, tag = 'scoped memory for tpu_custom_call.1']
    #allocation9 [shape = 'u8[16384]{0}', space=vmem, size = 0x4000, scoped, tag = 'input window, operand 5, single buffered']
    #allocation10 [shape = 'u8[4096]{0}', space=vmem, size = 0x1000, scoped, tag = 'output window, operand 0, single buffered']
    #allocation11 [shape = 'u8[4096]{0}', space=vmem, size = 0x1000, scoped, tag = 'output window, operand 1, single buffered']
    #allocation12 [shape = 's32[1]{0}', space=sflag, size = 0x4, scoped, tag = 'scoped memory for tpu_custom_call.1']
    #allocation13 [shape = 'u8[4096]{0}', space=vmem, size = 0x1000, scoped, tag = 'output window, operand 2, single buffered']
    %14 = vsyncpa [#allocation5], 0
    %15 = vsyncpa [#allocation8], 0
    %16 = vsyncpa [#allocation6], 0
    %17 = vsyncpa [#allocation12], 0
    loop: start=0, step=1, limit=18
    $region2: #{tpu_custom_call.1} parent=1 // loop_pre_header
      _
    $region3: #{tpu_custom_call.1} parent=1 // loop_header
      %s19 = sphi 0, %s23
      %p20 = scmp.ge.s32.totalorder %s19, 18
      %s29 = sphi 0, %s31
      %s32 = sphi 0, %s29
      %s33 = sphi 0, %s32
      %s49 = sphi 0, %s33
      %s55 = sphi 0, %s57
      %s58 = sphi 0, %s55
      %s59 = sphi 0, %s58
      %s75 = sphi 0, %s59
      %s79 = sphi 0, %s79
      %s81 = sphi 0, %s79
      %s82 = sphi 0, %s81
      %s96 = sphi 0, %s82
      %s100 = sphi 0, %s100
      %s102 = sphi 0, %s100
      %s103 = sphi 0, %s102
      %s117 = sphi 0, %s103
      %s121 = sphi 0, %s121
      %s123 = sphi 0, %s121
      %s124 = sphi 0, %s123
      %s138 = sphi 0, %s124
      %s142 = sphi 0, %s142
      %s144 = sphi 0, %s142
      %s145 = sphi 0, %s144
      %s159 = sphi 0, %s145
      %s163 = sphi 0, %s163
      %s165 = sphi 0, %s163
      %s166 = sphi 0, %s165
      %s180 = sphi 0, %s166
      %s184 = sphi 0, %s184
      %s186 = sphi 0, %s184
      %s187 = sphi 0, %s186
      %s201 = sphi 0, %s187
      %s205 = sphi 0, %s205
      %s207 = sphi 0, %s205
      %s208 = sphi 0, %s207
      %s222 = sphi 0, %s208
    $region4: #{tpu_custom_call.1} parent=1 // loop_header_branch
      %22 = sbr.rel (%p20) target = $region8
    $region5: #{tpu_custom_call.1} parent=1 // loop_body
      %s24 = ssub.s32 %s19, 1
      %s25 = ssub.s32 %s19, 2
      %s26 = sadd.s32 %s19, 1
      %s27 = ssub.s32 %s19, %s26
      %p28 = scmp.eq.s32.totalorder %s27, 0
      %s30 = sadd.s32 %s29, 1
      %s31 = scalar_select %p28, %s29, %s30
      %p34 = pneg %p28
      %p35 = scmp.eq.s32.totalorder %s19, 15
      %p36 = por %p34, %p35
      %p37 = scmp.ne.s32.totalorder %s29, %s32
      %p38 = scmp.eq.s32.totalorder %s19, 0
      %p39 = por %p37, %p38
      %p40 = scmp.ne.s32.totalorder %s29, %s32
      %p41 = scmp.eq.s32.totalorder %s24, 15
      %p42 = por %p40, %p41
      %p43 = scmp.ne.s32.totalorder %s32, %s33
      %p44 = scmp.eq.s32.totalorder %s24, 0
      %p45 = por %p43, %p44
      %p46 = scmp.ne.s32.totalorder %s32, %s33
      %p47 = scmp.eq.s32.totalorder %s25, 15
      %p48 = por %p46, %p47
      %p50 = scmp.ne.s32.totalorder %s33, %s49
      %p51 = scmp.eq.s32.totalorder %s25, 0
      %p52 = por %p50, %p51
      %s53 = ssub.s32 %s19, %s26
      %p54 = scmp.eq.s32.totalorder %s53, 0
      %s56 = sadd.s32 %s55, 1
      %s57 = scalar_select %p54, %s55, %s56
      %p60 = pneg %p54
      %p61 = scmp.eq.s32.totalorder %s19, 15
      %p62 = por %p60, %p61
      %p63 = scmp.ne.s32.totalorder %s55, %s58
      %p64 = scmp.eq.s32.totalorder %s19, 0
      %p65 = por %p63, %p64
      %p66 = scmp.ne.s32.totalorder %s55, %s58
      %p67 = scmp.eq.s32.totalorder %s24, 15
      %p68 = por %p66, %p67
      %p69 = scmp.ne.s32.totalorder %s58, %s59
      %p70 = scmp.eq.s32.totalorder %s24, 0
      %p71 = por %p69, %p70
      %p72 = scmp.ne.s32.totalorder %s58, %s59
      %p73 = scmp.eq.s32.totalorder %s25, 15
      %p74 = por %p72, %p73
      %p76 = scmp.ne.s32.totalorder %s59, %s75
      %p77 = scmp.eq.s32.totalorder %s25, 0
      %p78 = por %p76, %p77
      %s80 = sadd.s32 %s79, 1
      %p83 = scmp.eq.s32.totalorder %s19, 15
      %p84 = scmp.ne.s32.totalorder %s79, %s81
      %p85 = scmp.eq.s32.totalorder %s19, 0
      %p86 = por %p84, %p85
      %p87 = scmp.ne.s32.totalorder %s79, %s81
      %p88 = scmp.eq.s32.totalorder %s24, 15
      %p89 = por %p87, %p88
      %p90 = scmp.ne.s32.totalorder %s81, %s82
      %p91 = scmp.eq.s32.totalorder %s24, 0
      %p92 = por %p90, %p91
      %p93 = scmp.ne.s32.totalorder %s81, %s82
      %p94 = scmp.eq.s32.totalorder %s25, 15
      %p95 = por %p93, %p94
      %p97 = scmp.ne.s32.totalorder %s82, %s96
      %p98 = scmp.eq.s32.totalorder %s25, 0
      %p99 = por %p97, %p98
      %s101 = sadd.s32 %s100, 1
      %p104 = scmp.eq.s32.totalorder %s19, 15
      %p105 = scmp.ne.s32.totalorder %s100, %s102
      %p106 = scmp.eq.s32.totalorder %s19, 0
      %p107 = por %p105, %p106
      %p108 = scmp.ne.s32.totalorder %s100, %s102
      %p109 = scmp.eq.s32.totalorder %s24, 15
      %p110 = por %p108, %p109
      %p111 = scmp.ne.s32.totalorder %s102, %s103
      %p112 = scmp.eq.s32.totalorder %s24, 0
      %p113 = por %p111, %p112
      %p114 = scmp.ne.s32.totalorder %s102, %s103
      %p115 = scmp.eq.s32.totalorder %s25, 15
      %p116 = por %p114, %p115
      %p118 = scmp.ne.s32.totalorder %s103, %s117
      %p119 = scmp.eq.s32.totalorder %s25, 0
      %p120 = por %p118, %p119
      %s122 = sadd.s32 %s121, 1
      %p125 = scmp.eq.s32.totalorder %s19, 15
      %p126 = scmp.ne.s32.totalorder %s121, %s123
      %p127 = scmp.eq.s32.totalorder %s19, 0
      %p128 = por %p126, %p127
      %p129 = scmp.ne.s32.totalorder %s121, %s123
      %p130 = scmp.eq.s32.totalorder %s24, 15
      %p131 = por %p129, %p130
      %p132 = scmp.ne.s32.totalorder %s123, %s124
      %p133 = scmp.eq.s32.totalorder %s24, 0
      %p134 = por %p132, %p133
      %p135 = scmp.ne.s32.totalorder %s123, %s124
      %p136 = scmp.eq.s32.totalorder %s25, 15
      %p137 = por %p135, %p136
      %p139 = scmp.ne.s32.totalorder %s124, %s138
      %p140 = scmp.eq.s32.totalorder %s25, 0
      %p141 = por %p139, %p140
      %s143 = sadd.s32 %s142, 1
      %p146 = scmp.eq.s32.totalorder %s19, 15
      %p147 = scmp.ne.s32.totalorder %s142, %s144
      %p148 = scmp.eq.s32.totalorder %s19, 0
      %p149 = por %p147, %p148
      %p150 = scmp.ne.s32.totalorder %s142, %s144
      %p151 = scmp.eq.s32.totalorder %s24, 15
      %p152 = por %p150, %p151
      %p153 = scmp.ne.s32.totalorder %s144, %s145
      %p154 = scmp.eq.s32.totalorder %s24, 0
      %p155 = por %p153, %p154
      %p156 = scmp.ne.s32.totalorder %s144, %s145
      %p157 = scmp.eq.s32.totalorder %s25, 15
      %p158 = por %p156, %p157
      %p160 = scmp.ne.s32.totalorder %s145, %s159
      %p161 = scmp.eq.s32.totalorder %s25, 0
      %p162 = por %p160, %p161
      %s164 = sadd.s32 %s163, 1
      %p167 = scmp.eq.s32.totalorder %s19, 15
      %p168 = scmp.ne.s32.totalorder %s163, %s165
      %p169 = scmp.eq.s32.totalorder %s19, 0
      %p170 = por %p168, %p169
      %p171 = scmp.ne.s32.totalorder %s163, %s165
      %p172 = scmp.eq.s32.totalorder %s24, 15
      %p173 = por %p171, %p172
      %p174 = scmp.ne.s32.totalorder %s165, %s166
      %p175 = scmp.eq.s32.totalorder %s24, 0
      %p176 = por %p174, %p175
      %p177 = scmp.ne.s32.totalorder %s165, %s166
      %p178 = scmp.eq.s32.totalorder %s25, 15
      %p179 = por %p177, %p178
      %p181 = scmp.ne.s32.totalorder %s166, %s180
      %p182 = scmp.eq.s32.totalorder %s25, 0
      %p183 = por %p181, %p182
      %s185 = sadd.s32 %s184, 1
      %p188 = scmp.eq.s32.totalorder %s19, 15
      %p189 = scmp.ne.s32.totalorder %s184, %s186
      %p190 = scmp.eq.s32.totalorder %s19, 0
      %p191 = por %p189, %p190
      %p192 = scmp.ne.s32.totalorder %s184, %s186
      %p193 = scmp.eq.s32.totalorder %s24, 15
      %p194 = por %p192, %p193
      %p195 = scmp.ne.s32.totalorder %s186, %s187
      %p196 = scmp.eq.s32.totalorder %s24, 0
      %p197 = por %p195, %p196
      %p198 = scmp.ne.s32.totalorder %s186, %s187
      %p199 = scmp.eq.s32.totalorder %s25, 15
      %p200 = por %p198, %p199
      %p202 = scmp.ne.s32.totalorder %s187, %s201
      %p203 = scmp.eq.s32.totalorder %s25, 0
      %p204 = por %p202, %p203
      %s206 = sadd.s32 %s205, 1
      %p209 = scmp.eq.s32.totalorder %s19, 15
      %p210 = scmp.ne.s32.totalorder %s205, %s207
      %p211 = scmp.eq.s32.totalorder %s19, 0
      %p212 = por %p210, %p211
      %p213 = scmp.ne.s32.totalorder %s205, %s207
      %p214 = scmp.eq.s32.totalorder %s24, 15
      %p215 = por %p213, %p214
      %p216 = scmp.ne.s32.totalorder %s207, %s208
      %p217 = scmp.eq.s32.totalorder %s24, 0
      %p218 = por %p216, %p217
      %p219 = scmp.ne.s32.totalorder %s207, %s208
      %p220 = scmp.eq.s32.totalorder %s25, 15
      %p221 = por %p219, %p220
      %p223 = scmp.ne.s32.totalorder %s208, %s222
      %p224 = scmp.eq.s32.totalorder %s25, 0
      %p225 = por %p223, %p224
      %p226 = scmp.le.s32.totalorder 1, %s19
      %p227 = scmp.lt.s32.totalorder %s19, 17
      %p228 = pnand %p226, %p227
      %p229 = pneg %p228
      // Predicated region
      $region9: #{tpu_custom_call.1} parent=5 // pred_check
        _
      $region10: #{tpu_custom_call.1} parent=5 // pred_check_branch
        %231 = sbr.rel (%p228) target = $region12
      $region11: #{tpu_custom_call.1} parent=5 // pred_region
        %s232 = ssub.s32 %s19, 1
        // Predicated region
        $region13: #{tpu_custom_call.1} parent=11 // pred_check
          %p233 = pneg %p92
        $region14: #{tpu_custom_call.1} parent=11 // pred_check_branch
          %235 = sbr.rel (%p233) target = $region16
        $region15: #{tpu_custom_call.1} parent=11 // pred_region
          _
        $region16: #{tpu_custom_call.1} parent=11 // pred_fallthru
          _
        // Predicated region
        $region17: #{tpu_custom_call.1} parent=11 // pred_check
          %p236 = pneg %p113
        $region18: #{tpu_custom_call.1} parent=11 // pred_check_branch
          %238 = sbr.rel (%p236) target = $region20
        $region19: #{tpu_custom_call.1} parent=11 // pred_region
          %s240 = ssub.s32 128, 128
          %241 = vsyncadd [#allocation5], %s240
          %s243 = sshll.u32 [#allocation4], 4
          %s244 = int_to_ptr.vmem [resolvable:$true] %s243
          %246 = dma.hbm_to_vmem [thread:$0]  %s3, 128, %s244, [#allocation5]
        $region20: #{tpu_custom_call.1} parent=11 // pred_fallthru
          _
        // Predicated region
        $region21: #{tpu_custom_call.1} parent=11 // pred_check
          %p247 = pneg %p134
        $region22: #{tpu_custom_call.1} parent=11 // pred_check_branch
          %249 = sbr.rel (%p247) target = $region24
        $region23: #{tpu_custom_call.1} parent=11 // pred_region
          %s251 = ssub.s32 1024, 1024
          %252 = vsyncadd [#allocation8], %s251
          %s253 = sshll.u32 [#allocation7], 4
          %s254 = int_to_ptr.vmem [resolvable:$true] %s253
          %259 = dma.hbm_to_vmem [thread:$0]  %s4, 1024, %s254, [#allocation8], 128, 128, 8
        $region24: #{tpu_custom_call.1} parent=11 // pred_fallthru
          _
        // Predicated region
        $region25: #{tpu_custom_call.1} parent=11 // pred_check
          %p260 = pneg %p155
        $region26: #{tpu_custom_call.1} parent=11 // pred_check_branch
          %262 = sbr.rel (%p260) target = $region28
        $region27: #{tpu_custom_call.1} parent=11 // pred_region
          %s264 = ssub.s32 512, 512
          %265 = vsyncadd [#allocation8], %s264
          %s266 = sshll.u32 [#allocation9], 4
          %s267 = int_to_ptr.vmem [resolvable:$true] %s266
          %272 = dma.hbm_to_vmem [thread:$0]  %s5, 512, %s267, [#allocation8], 128, 128, 8
        $region28: #{tpu_custom_call.1} parent=11 // pred_fallthru
          _
      $region12: #{tpu_custom_call.1} parent=5 // pred_fallthru
        _
      %p273 = scmp.lt.s32.totalorder %s19, 16
      // Predicated region
      $region29: #{tpu_custom_call.1} parent=5 // pred_check
        %p274 = pneg %p273
      $region30: #{tpu_custom_call.1} parent=5 // pred_check_branch
        %276 = sbr.rel (%p274) target = $region32
      $region31: #{tpu_custom_call.1} parent=5 // pred_region
        // Predicated region
        $region33: #{tpu_custom_call.1} parent=31 // pred_check
          %p277 = pneg %p39
        $region34: #{tpu_custom_call.1} parent=31 // pred_check_branch
          %279 = sbr.rel (%p277) target = $region36
        $region35: #{tpu_custom_call.1} parent=31 // pred_region
          %p280 = scmp.lt.s32.totalorder %s19, 15
          %s281 = scalar_select %p280, %s19, 15
          %s282 = smul.addr %s281, 8
          %s283 = scalar_lea.vmem %s0, %s282
        $region36: #{tpu_custom_call.1} parent=31 // pred_fallthru
          _
        // Predicated region
        $region37: #{tpu_custom_call.1} parent=31 // pred_check
          %p284 = pneg %p65
        $region38: #{tpu_custom_call.1} parent=31 // pred_check_branch
          %286 = sbr.rel (%p284) target = $region40
        $region39: #{tpu_custom_call.1} parent=31 // pred_region
          %p287 = scmp.lt.s32.totalorder %s19, 15
          %s288 = scalar_select %p287, %s19, 15
          %s289 = smul.addr %s288, 8
          %s290 = scalar_lea.vmem %s1, %s289
        $region40: #{tpu_custom_call.1} parent=31 // pred_fallthru
          _
      $region32: #{tpu_custom_call.1} parent=5 // pred_fallthru
        _
      %p291 = scmp.le.s32.totalorder 1, %s19
      %p292 = scmp.lt.s32.totalorder %s19, 17
      %p293 = pnand %p291, %p292
      %p294 = pneg %p293
      // Predicated region
      $region41: #{tpu_custom_call.1} parent=5 // pred_check
        _
      $region42: #{tpu_custom_call.1} parent=5 // pred_check_branch
        %296 = sbr.rel (%p293) target = $region44
      $region43: #{tpu_custom_call.1} parent=5 // pred_region
        %s297 = ssub.s32 %s19, 1
        // Predicated region
        $region45: #{tpu_custom_call.1} parent=43 // pred_check
          %p298 = pneg %p113
        $region46: #{tpu_custom_call.1} parent=43 // pred_check_branch
          %300 = sbr.rel (%p298) target = $region48
        $region47: #{tpu_custom_call.1} parent=43 // pred_region
          %301 = dma.done [#allocation5], 128
        $region48: #{tpu_custom_call.1} parent=43 // pred_fallthru
          _
        // Predicated region
        $region49: #{tpu_custom_call.1} parent=43 // pred_check
          %p302 = pneg %p134
        $region50: #{tpu_custom_call.1} parent=43 // pred_check_branch
          %304 = sbr.rel (%p302) target = $region52
        $region51: #{tpu_custom_call.1} parent=43 // pred_region
          %305 = dma.done [#allocation8], 1024
        $region52: #{tpu_custom_call.1} parent=43 // pred_fallthru
          _
        // Predicated region
        $region53: #{tpu_custom_call.1} parent=43 // pred_check
          %p306 = pneg %p155
        $region54: #{tpu_custom_call.1} parent=43 // pred_check_branch
          %308 = sbr.rel (%p306) target = $region56
        $region55: #{tpu_custom_call.1} parent=43 // pred_region
          %309 = dma.done [#allocation8], 512
        $region56: #{tpu_custom_call.1} parent=43 // pred_fallthru
          _
        %p310 = scmp.lt.s32.totalorder %s24, 15
        %s311 = scalar_select %p310, %s24, 15
        %s312 = smul.addr %s311, 8
        %s313 = scalar_lea.vmem %s0, %s312
        %p314 = pneg %p45
        %p315 = pneg %p42
        %p316 = scmp.lt.s32.totalorder %s24, 15
        %s317 = scalar_select %p316, %s24, 15
        %s318 = smul.addr %s317, 8
        %s319 = scalar_lea.vmem %s1, %s318
        %p320 = pneg %p71
        %p321 = pneg %p68
        %p322 = pneg %p92
        %p323 = pneg %p89
        %p324 = pneg %p113
        %p325 = pneg %p110
        %p326 = pneg %p134
        %p327 = pneg %p131
        %p328 = pneg %p155
        %p329 = pneg %p152
        %p330 = pneg %p176
        %p331 = pneg %p173
        %p332 = pneg %p197
        %p333 = pneg %p194
        %p334 = pneg %p218
        %p335 = pneg %p215
        %p336 = scmp.lt.s32.totalorder %s24, 15
        %s337 = scalar_select %p336, %s24, 15
        %s338 = smul.addr %s337, 8
        %s339 = scalar_lea.vmem %s0, %s338
        %p340 = scmp.lt.s32.totalorder %s24, 15
        %s341 = scalar_select %p340, %s24, 15
        %s342 = smul.addr %s341, 8
        %s343 = scalar_lea.vmem %s1, %s342
        %p344 = scmp.eq.s32.totalorder %s24, 0
        // Predicated region
        $region57: #{tpu_custom_call.1} parent=43 // pred_check
          %p345 = pneg %p344
        $region58: #{tpu_custom_call.1} parent=43 // pred_check_branch
          %347 = sbr.rel (%p345) target = $region60
        $region59: #{tpu_custom_call.1} parent=43 // pred_region
          %v348 = vld [vmem:[%s2] sm:$0xff]
          %vm349 = vcmask 261120
          %350 = vst.msk [vmem:[#allocation2] sm:$0xff] %vm349, %v348
          %v351 = vld [vmem:[#allocation4] sm:$0xff]
          %352 = vst.msk [vmem:[#allocation3] sm:$0xff] %vm349, %v351
          %vm353 = vcmask 130048
          %354 = vst.msk [vmem:[#allocation13] sm:$0xff] %vm353, 0.0
        $region60: #{tpu_custom_call.1} parent=43 // pred_fallthru
          _
        %v355 = vld [vmem:[%s339] sm:$0xff]
        %v356 = vld [vmem:[#allocation2] sm:$0xff]
        %v357 = vld [vmem:[#allocation3] sm:$0xff]
        %359 = vrot.lane.b32.xlu0 %v356, 32
        %v360 = vpop.permute.xlu0 %359
        %vm362 = vcmask 261120
        %v363 = vsel %vm362, %v355, %v360
        %v364 = vld [vmem:[#allocation7] sm:$0xff]
        %v365 = vld [vmem:[#allocation7 + $0x8] sm:$0xff]
        %v366 = vld [vmem:[#allocation7 + $0x10] sm:$0xff]
        %v367 = vld [vmem:[#allocation7 + $0x18] sm:$0xff]
        %v368 = vld [vmem:[#allocation7 + $0x20] sm:$0xff]
        %v369 = vld [vmem:[#allocation7 + $0x28] sm:$0xff]
        %v370 = vld [vmem:[#allocation7 + $0x30] sm:$0xff]
        %v371 = vld [vmem:[#allocation7 + $0x38] sm:$0xff]
        %vm372 = vcmask 523264
        %v374 = vsel %vm372, %v363, 0
        %376 = vmatprep.subr.mxu0 0.0
        %377 = vmatpush1.msra.mxu0 0.0
        %378 = vmatprep.subr.mxu0 0.0
        %379 = vmatpush1.msra.mxu0 0.0
        %380 = vmatprep.subr.mxu0 0.0
        %381 = vmatpush1.msra.mxu0 0.0
        %382 = vmatprep.subr.mxu0 0.0
        %383 = vmatpush1.msra.mxu0 0.0
        %384 = vmatprep.subr.mxu0 0.0
        %385 = vmatpush1.msra.mxu0 0.0
        %386 = vmatprep.subr.mxu0 0.0
        %387 = vmatpush1.msra.mxu0 0.0
        %388 = vmatprep.subr.mxu0 0.0
        %389 = vmatpush1.msra.mxu0 0.0
        %390 = vmatprep.subr.mxu0 0.0
        %391 = vmatpush1.msra.mxu0 0.0
        %392 = vmatprep.subr.mxu0 0.0
        %393 = vmatpush1.msra.mxu0 %v371
        %394 = vmatprep.subr.mxu0 0.0
        %395 = vmatpush1.msra.mxu0 %v370
        %396 = vmatprep.subr.mxu0 0.0
        %397 = vmatpush1.msra.mxu0 %v369
        %398 = vmatprep.subr.mxu0 0.0
        %399 = vmatpush1.msra.mxu0 %v368
        %400 = vmatprep.subr.mxu0 0.0
        %401 = vmatpush1.msra.mxu0 %v367
        %402 = vmatprep.subr.mxu0 0.0
        %403 = vmatpush1.msra.mxu0 %v366
        %404 = vmatprep.subr.mxu0 0.0
        %405 = vmatpush1.msra.mxu0 %v365
        %406 = vmatprep.subr.mxu0 0.0
        %407 = vmatpush1.msra.mxu0 %v364
        %408 = vmatprep.subr.mxu0 0.0
        %409 = vmatpush2.msra.mxu0 0.0
        %410 = vmatprep.subr.mxu0 0.0
        %411 = vmatpush2.msra.mxu0 0.0
        %412 = vmatprep.subr.mxu0 0.0
        %413 = vmatpush2.msra.mxu0 0.0
        %414 = vmatprep.subr.mxu0 0.0
        %415 = vmatpush2.msra.mxu0 0.0
        %416 = vmatprep.subr.mxu0 0.0
        %417 = vmatpush2.msra.mxu0 0.0
        %418 = vmatprep.subr.mxu0 0.0
        %419 = vmatpush2.msra.mxu0 0.0
        %420 = vmatprep.subr.mxu0 0.0
        %421 = vmatpush2.msra.mxu0 0.0
        %422 = vmatprep.subr.mxu0 0.0
        %423 = vmatpush2.msra.mxu0 0.0
        %424 = vmatprep.subr.mxu0 0.0
        %425 = vmatpush2.msra.mxu0 0.0
        %426 = vmatprep.subr.mxu0 0.0
        %427 = vmatpush2.msra.mxu0 0.0
        %428 = vmatprep.subr.mxu0 0.0
        %429 = vmatpush2.msra.mxu0 0.0
        %430 = vmatprep.subr.mxu0 0.0
        %431 = vmatpush2.msra.mxu0 0.0
        %432 = vmatprep.subr.mxu0 0.0
        %433 = vmatpush2.msra.mxu0 0.0
        %434 = vmatprep.subr.mxu0 0.0
        %435 = vmatpush2.msra.mxu0 0.0
        %436 = vmatprep.subr.mxu0 0.0
        %437 = vmatpush2.msra.mxu0 0.0
        %438 = vmatprep.subr.mxu0 0.0
        %439 = vmatpush2.msra.mxu0 0.0
        %440 = vmatprep.mubr.f32.mxu0 0.0
        %441 = vmatmul.mubr.f32.gmra.mxu0 %v374
        %v442 = vpop.f32.mrf.mxu0
        %v443 = vadd.f32 0.0, %v442
        %v444 = vpop.f32.mrf.mxu0
        %445 = vdwg.mxu0
        %v446 = vxor.u32 %v443, 2147483648
        %v447 = vmul.f32 %v446, 1.442695
        %v448 = vpow.pop %v447
        %v449 = vadd.f32 %v448, 1.0
        %v450 = vrcp.pop %v449
        %v451 = vmul.f32 1.0, %v450
        %v452 = vtanh.pop %v443
        %454 = vrot.lane.b32.xlu0 %v452, 32
        %v455 = vpop.permute.xlu0 %454
        %v457 = vmul.f32 %v451, %v455
        %459 = vrot.lane.b32.xlu0 %v357, 32
        %v460 = vpop.permute.xlu0 %459
        %v462 = vmul.f32 %v451, %v460
        %464 = vrot.lane.b32.xlu0 %v462, 96
        %v465 = vpop.permute.xlu0 %464
        %v467 = vadd.f32 %v457, %v465
        %v468 = vtanh.pop %v467
        %470 = vrot.lane.b32.xlu0 %v468, 64
        %v471 = vpop.permute.xlu0 %470
        %v473 = vmul.f32 %v451, %v471
        %v474 = vld [vmem:[#allocation9] sm:$0xff]
        %v475 = vld [vmem:[#allocation9 + $0x8] sm:$0xff]
        %v476 = vld [vmem:[#allocation9 + $0x10] sm:$0xff]
        %v477 = vld [vmem:[#allocation9 + $0x18] sm:$0xff]
        %479 = vrot.lane.b32.xlu0 %v473, 64
        %v480 = vpop.permute.xlu0 %479
        %v481 = vsel %vm362, %v480, 0
        %483 = vmatprep.subr.mxu0 0.0
        %484 = vmatpush1.msra.mxu0 0.0
        %485 = vmatprep.subr.mxu0 0.0
        %486 = vmatpush1.msra.mxu0 0.0
        %487 = vmatprep.subr.mxu0 0.0
        %488 = vmatpush1.msra.mxu0 0.0
        %489 = vmatprep.subr.mxu0 0.0
        %490 = vmatpush1.msra.mxu0 0.0
        %491 = vmatprep.subr.mxu0 0.0
        %492 = vmatpush1.msra.mxu0 0.0
        %493 = vmatprep.subr.mxu0 0.0
        %494 = vmatpush1.msra.mxu0 0.0
        %495 = vmatprep.subr.mxu0 0.0
        %496 = vmatpush1.msra.mxu0 0.0
        %497 = vmatprep.subr.mxu0 0.0
        %498 = vmatpush1.msra.mxu0 0.0
        %499 = vmatprep.subr.mxu0 0.0
        %500 = vmatpush1.msra.mxu0 0.0
        %501 = vmatprep.subr.mxu0 0.0
        %502 = vmatpush1.msra.mxu0 0.0
        %503 = vmatprep.subr.mxu0 0.0
        %504 = vmatpush1.msra.mxu0 0.0
        %505 = vmatprep.subr.mxu0 0.0
        %506 = vmatpush1.msra.mxu0 0.0
        %507 = vmatprep.subr.mxu0 0.0
        %508 = vmatpush1.msra.mxu0 %v477
        %509 = vmatprep.subr.mxu0 0.0
        %510 = vmatpush1.msra.mxu0 %v476
        %511 = vmatprep.subr.mxu0 0.0
        %512 = vmatpush1.msra.mxu0 %v475
        %513 = vmatprep.subr.mxu0 0.0
        %514 = vmatpush1.msra.mxu0 %v474
        %515 = vmatprep.subr.mxu0 0.0
        %516 = vmatpush2.msra.mxu0 0.0
        %517 = vmatprep.subr.mxu0 0.0
        %518 = vmatpush2.msra.mxu0 0.0
        %519 = vmatprep.subr.mxu0 0.0
        %520 = vmatpush2.msra.mxu0 0.0
        %521 = vmatprep.subr.mxu0 0.0
        %522 = vmatpush2.msra.mxu0 0.0
        %523 = vmatprep.subr.mxu0 0.0
        %524 = vmatpush2.msra.mxu0 0.0
        %525 = vmatprep.subr.mxu0 0.0
        %526 = vmatpush2.msra.mxu0 0.0
        %527 = vmatprep.subr.mxu0 0.0
        %528 = vmatpush2.msra.mxu0 0.0
        %529 = vmatprep.subr.mxu0 0.0
        %530 = vmatpush2.msra.mxu0 0.0
        %531 = vmatprep.subr.mxu0 0.0
        %532 = vmatpush2.msra.mxu0 0.0
        %533 = vmatprep.subr.mxu0 0.0
        %534 = vmatpush2.msra.mxu0 0.0
        %535 = vmatprep.subr.mxu0 0.0
        %536 = vmatpush2.msra.mxu0 0.0
        %537 = vmatprep.subr.mxu0 0.0
        %538 = vmatpush2.msra.mxu0 0.0
        %539 = vmatprep.subr.mxu0 0.0
        %540 = vmatpush2.msra.mxu0 0.0
        %541 = vmatprep.subr.mxu0 0.0
        %542 = vmatpush2.msra.mxu0 0.0
        %543 = vmatprep.subr.mxu0 0.0
        %544 = vmatpush2.msra.mxu0 0.0
        %545 = vmatprep.subr.mxu0 0.0
        %546 = vmatpush2.msra.mxu0 0.0
        %547 = vmatprep.mubr.f32.mxu0 0.0
        %548 = vmatmul.mubr.f32.gmra.mxu0 %v481
        %v549 = vpop.f32.mrf.mxu0
        %v550 = vadd.f32 0.0, %v549
        %v551 = vpop.f32.mrf.mxu0
        %552 = vdwg.mxu0
        %553 = vmax.xlane.f32.xlu0 %v550
        %v554 = vpop.xlane.xlu0 %553
        %v555 = vsub.f32 %v550, %v554
        %v556 = vmul.f32 %v555, 1.442695
        %v557 = vpow.pop %v556
        %v558 = vld [vmem:[%s343] sm:$0xff]
        %v559 = vlaneseq
        %v560 = vand.u32 %v559, 127
        %561 = vset.pattern.permute.xlu0 0
        %562 = vperm.xlu0 %561, %v558
        %v563 = vpop.permute.xlu0 %562
        %vm564 = vcmp.eq.s32.totalorder %v560, %v563
        %v565 = vsel %vm564, %v557, 0.0
        %566 = vadd.xlane.f32.xlu0 %v565
        %v567 = vpop.xlane.xlu0 %566
        %568 = vadd.xlane.f32.xlu0 %v557
        %v569 = vpop.xlane.xlu0 %568
        %v570 = vrcp.pop %v569
        %v571 = vmul.f32 %v567, %v570
        %573 = vst.msk [vmem:[#allocation2] sm:$0xff] %vm362, %v480
        %574 = vst.msk [vmem:[#allocation3] sm:$0xff] %vm362, %v467
        %v575 = vstv %s24
        %vm576 = vcmp.eq.s32.totalorder %v560, %v575
        %v577 = vld [vmem:[#allocation13] sm:$0xff]
        %v578 = vsel %vm576, %v571, %v577
        %vm579 = vcmask 130048
        %580 = vst.msk [vmem:[#allocation13] sm:$0xff] %vm579, %v578
        %p581 = scmp.eq.s32.totalorder %s24, 15
        // Predicated region
        $region61: #{tpu_custom_call.1} parent=43 // pred_check
          %p582 = pneg %p581
        $region62: #{tpu_custom_call.1} parent=43 // pred_check_branch
          %584 = sbr.rel (%p582) target = $region64
        $region63: #{tpu_custom_call.1} parent=43 // pred_region
          %585 = vst.msk [vmem:[#allocation10] sm:$0xff] %vm362, %v480
          %586 = vst.msk [vmem:[#allocation11] sm:$0xff] %vm362, %v467
        $region64: #{tpu_custom_call.1} parent=43 // pred_fallthru
          _
        // Predicated region
        $region65: #{tpu_custom_call.1} parent=43 // pred_check
          %p587 = pneg %p173
        $region66: #{tpu_custom_call.1} parent=43 // pred_check_branch
          %589 = sbr.rel (%p587) target = $region68
        $region67: #{tpu_custom_call.1} parent=43 // pred_region
          %s591 = ssub.s32 128, 128
          %592 = vsyncadd [#allocation6], %s591
          %s594 = sshll.u32 [#allocation10], 4
          %s595 = int_to_ptr.vmem [resolvable:$true] %s594
          %597 = dma.vmem_to_hbm [thread:$0]  %s595, 128, %s6, [#allocation6]
        $region68: #{tpu_custom_call.1} parent=43 // pred_fallthru
          _
        // Predicated region
        $region69: #{tpu_custom_call.1} parent=43 // pred_check
          %p598 = pneg %p194
        $region70: #{tpu_custom_call.1} parent=43 // pred_check_branch
          %600 = sbr.rel (%p598) target = $region72
        $region71: #{tpu_custom_call.1} parent=43 // pred_region
          %s602 = ssub.s32 128, 128
          %603 = vsyncadd [#allocation12], %s602
          %s605 = sshll.u32 [#allocation11], 4
          %s606 = int_to_ptr.vmem [resolvable:$true] %s605
          %608 = dma.vmem_to_hbm [thread:$0]  %s606, 128, %s7, [#allocation12]
        $region72: #{tpu_custom_call.1} parent=43 // pred_fallthru
          _
        // Predicated region
        $region73: #{tpu_custom_call.1} parent=43 // pred_check
          %p609 = pneg %p215
        $region74: #{tpu_custom_call.1} parent=43 // pred_check_branch
          %611 = sbr.rel (%p609) target = $region76
        $region75: #{tpu_custom_call.1} parent=43 // pred_region
          %s613 = ssub.s32 128, 128
          %614 = vsyncadd [#allocation12], %s613
          %s616 = sshll.u32 [#allocation13], 4
          %s617 = int_to_ptr.vmem [resolvable:$true] %s616
          %619 = dma.vmem_to_hbm [thread:$0]  %s617, 128, %s8, [#allocation12]
        $region76: #{tpu_custom_call.1} parent=43 // pred_fallthru
          _
        // Predicated region
        $region77: #{tpu_custom_call.1} parent=43 // pred_check
          %p620 = pneg %p173
        $region78: #{tpu_custom_call.1} parent=43 // pred_check_branch
          %622 = sbr.rel (%p620) target = $region80
        $region79: #{tpu_custom_call.1} parent=43 // pred_region
          %623 = dma.done [#allocation6], 128
        $region80: #{tpu_custom_call.1} parent=43 // pred_fallthru
          _
        // Predicated region
        $region81: #{tpu_custom_call.1} parent=43 // pred_check
          %p624 = pneg %p194
        $region82: #{tpu_custom_call.1} parent=43 // pred_check_branch
          %626 = sbr.rel (%p624) target = $region84
        $region83: #{tpu_custom_call.1} parent=43 // pred_region
          %627 = dma.done [#allocation12], 128
        $region84: #{tpu_custom_call.1} parent=43 // pred_fallthru
          _
        // Predicated region
        $region85: #{tpu_custom_call.1} parent=43 // pred_check
          %p628 = pneg %p215
        $region86: #{tpu_custom_call.1} parent=43 // pred_check_branch
          %630 = sbr.rel (%p628) target = $region88
        $region87: #{tpu_custom_call.1} parent=43 // pred_region
          %631 = dma.done [#allocation12], 128
        $region88: #{tpu_custom_call.1} parent=43 // pred_fallthru
          _
      $region44: #{tpu_custom_call.1} parent=5 // pred_fallthru
        _
      %p632 = scmp.le.s32.totalorder 2, %s19
      // Predicated region
      $region89: #{tpu_custom_call.1} parent=5 // pred_check
        %p633 = pneg %p632
      $region90: #{tpu_custom_call.1} parent=5 // pred_check_branch
        %635 = sbr.rel (%p633) target = $region92
      $region91: #{tpu_custom_call.1} parent=5 // pred_region
        %s636 = ssub.s32 %s19, 2
      $region92: #{tpu_custom_call.1} parent=5 // pred_fallthru
        _
    $region6: #{tpu_custom_call.1} parent=1 // loop_footer
      %s23 = sadd.s32 1, %s19
    $region7: #{tpu_custom_call.1} parent=1 // loop_footer_branch
      %18 = sbr.rel target = $region3
    $region8: #{tpu_custom_call.1} parent=1 // loop_exit
      _
    %637 = vsyncpa [#allocation5], 1
    %s638 = scalar_lea.sflag [#allocation5], 1
    %639 = vsyncpa %s638, 1
    %640 = vsyncpa [#allocation8], 1
    %641 = vsyncpa [#allocation6], 1
    %s642 = scalar_lea.sflag [#allocation6], 1
    %643 = vsyncpa %s642, 1
    %644 = vsyncpa [#allocation12], 1

</llo_original>
